<compile_context>
chip_gen: v7x
topology: tpu7x:2x2x1
jax: 0.10.0
libtpu: 0.0.40
codegen_flags: <defaults>
</compile_context>

<pallas_src>
import math
import numpy as np
import jax
import jax.numpy as jnp
from jax import lax
from jax.experimental import pallas as pl
from jax.experimental.pallas import tpu as pltpu

# ------------------------------------------------------------------
# Slicer configuration (mirrors the PyTorch __init__, deterministic)
# ------------------------------------------------------------------
MAX_BLOCKS = 8
BLOCK_SIZE = 20
OFFSET_STEPS = 0

# deterministic block mask: keep every token except positions 4, 9, 14, 19
BLOCK_MASK = np.ones(BLOCK_SIZE, dtype=bool)
BLOCK_MASK[[4, 9, 14, 19]] = False
NUM_KEPT = int(BLOCK_MASK.sum())            # 16  (power of two)
L = MAX_BLOCKS * NUM_KEPT                   # 128 -> one full lane
SUBLANE = 8
_KEPT_SHIFT = NUM_KEPT.bit_length() - 1     # 4

# buffer `indices` exactly as built in the PyTorch __init__ (sorted ascending)
_kept = np.where(BLOCK_MASK)[0]
INDICES_NP = (np.tile(_kept, MAX_BLOCKS)
              + BLOCK_SIZE * np.repeat(np.arange(MAX_BLOCKS), NUM_KEPT)
              ).astype(np.int32)             # (L,)


# ------------------------------------------------------------------
# Closed forms (specific to this deterministic mask) — verified at import
# against the generic construction so a mask change fails loudly.
# ------------------------------------------------------------------
def _closed_indices(k):
    k = np.asarray(k, np.int64)
    m = k & (NUM_KEPT - 1)
    return (k >> _KEPT_SHIFT) * BLOCK_SIZE + m + (m >> 2)


def _closed_lower_bound(v):
    """# of entries of the sorted index table strictly < v (clamped to [0, L])."""
    v = np.asarray(v, np.int64)
    q = v // BLOCK_SIZE
    r = v - q * BLOCK_SIZE
    return np.clip(q * NUM_KEPT + (r - r // 5), 0, L).astype(np.int32)


assert np.array_equal(_closed_indices(np.arange(L)), INDICES_NP)
_probe = np.arange(-8, 4 * L)
assert np.array_equal(
    _closed_lower_bound(_probe),
    np.searchsorted(INDICES_NP, _probe, side="left").astype(np.int32))


# ------------------------------------------------------------------
# Pallas kernel: one (B, 128) slab, pure VALU, single unmasked store
# ------------------------------------------------------------------
def _slicer_kernel(prev_ref, start_ref, count_ref, out_ref):
    # prev_ref / start_ref / count_ref : (B, 1) int32 VMEM
    # out_ref                          : (B, L) int32 VMEM, -1 padded
    batch, lanes = out_ref.shape
    lane = lax.broadcasted_iota(jnp.int32, (batch, lanes), 1)
    k = start_ref[...] + lane                                # table position
    m = k & (NUM_KEPT - 1)
    idx_val = (k >> _KEPT_SHIFT) * BLOCK_SIZE + m + (m >> 2)  # INDICES[k]
    keep = lane < count_ref[...]
    out_ref[...] = jnp.where(keep, idx_val - prev_ref[...], -1)


def _slicer_call(prev_col, start_col, count_col):
    batch = prev_col.shape[0]
    vmem = pl.BlockSpec(memory_space=pltpu.MemorySpace.VMEM)
    return pl.pallas_call(
        _slicer_kernel,
        out_shape=jax.ShapeDtypeStruct((batch, L), jnp.int32),
        in_specs=[vmem, vmem, vmem],
        out_specs=vmem,
    )(prev_col, start_col, count_col)


_slicer_call_jit = jax.jit(_slicer_call)


# ------------------------------------------------------------------
# Wrappers
# ------------------------------------------------------------------
def compute_slices_device(num_steps, prev_steps):
    """Batched device path: returns (padded (B, L) int32, counts (B, 1) int32).

    Scalar prep (lower bounds / counts) is host closed-form math since
    num_steps / prev_steps are host scalars in the original module; the device
    kernel does only the vectorized rebase + padding.
    """
    prev = np.atleast_1d(np.asarray(prev_steps, np.int64)) - OFFSET_STEPS
    num = np.atleast_1d(np.asarray(num_steps, np.int64))
    total = num + prev
    start = _closed_lower_bound(prev)
    end = _closed_lower_bound(total)
    count = np.maximum(end - start, 0).astype(np.int32)

    batch = prev.shape[0]
    padded_b = max(SUBLANE, ((batch + SUBLANE - 1) // SUBLANE) * SUBLANE)

    def col(a):
        buf = np.zeros((padded_b, 1), np.int32)
        buf[:batch, 0] = a
        return jnp.asarray(buf)

    padded = _slicer_call_jit(col(prev), col(start), col(count))
    return padded[:batch], jnp.asarray(count.reshape(batch, 1))


def compute_slice(num_steps: int, prev_steps: int = 0) -> np.ndarray:
    """API-parity convenience path (trims on host -> forces a device sync)."""
    padded, counts = compute_slices_device([num_steps], [prev_steps])
    n = int(np.asarray(counts)[0, 0])
    return np.asarray(jax.device_get(padded))[0, :n]


# TODO(synk): Slicer.forward itself raises NotImplementedError in PyTorch; only
# compute_slice (the actual tensor computation) is implemented here.


# ------------------------------------------------------------------
# Pure-numpy reference (mirrors the PyTorch compute_slice exactly)
# ------------------------------------------------------------------
def ref_compute_slice(num_steps: int, prev_steps: int = 0) -> np.ndarray:
    prev = prev_steps - OFFSET_STEPS
    total = num_steps + prev
    num_blocks = math.ceil(total / BLOCK_SIZE)
    ind = INDICES_NP[: num_blocks * NUM_KEPT]
    return (ind[np.logical_and(prev <= ind, ind < total)] - prev).astype(np.int32)


if __name__ == "__main__":
    key = jax.random.PRNGKey(0)
    k1, k2 = jax.random.split(key)
    prev_cases = np.asarray(jax.random.randint(k1, (3,), 0, 60)).tolist()
    num_cases = np.asarray(jax.random.randint(k2, (3,), 1, 41)).tolist()

    # one batched launch for all (prev, num) pairs
    padded, counts = compute_slices_device(num_cases, prev_cases)
    padded, counts = jax.block_until_ready((padded, counts))
    padded_np, counts_np = np.asarray(padded), np.asarray(counts)

    for r in range(len(num_cases)):
        want = ref_compute_slice(int(num_cases[r]), int(prev_cases[r]))
        n = int(counts_np[r, 0])
        assert n == want.shape[0], (r, n, want.shape)
        assert np.array_equal(padded_np[r, :n], want), (r, padded_np[r], want)
        assert np.all(padded_np[r, n:] == -1), (r, padded_np[r])

    # edge cases: empty slice (count == 0) and full-table slice
    padded2, counts2 = compute_slices_device([1, 160], [4, 0])
    padded2, counts2 = jax.block_until_ready((padded2, counts2))
    p2, c2 = np.asarray(padded2), np.asarray(counts2)
    for r, (ns, ps) in enumerate([(1, 4), (160, 0)]):
        want = ref_compute_slice(ns, ps)
        n = int(c2[r, 0])
        assert n == want.shape[0], (r, n, want.shape)
        assert np.array_equal(p2[r, :n], want), (r, p2[r], want)
        assert np.all(p2[r, n:] == -1), (r, p2[r])

    # single-pair API-parity path
    got = compute_slice(int(num_cases[0]), int(prev_cases[0]))
    want = ref_compute_slice(int(num_cases[0]), int(prev_cases[0]))
    assert got.shape == want.shape and np.array_equal(got, want), (got, want)

    print("KERNEL_OK")
</pallas_src>

<mosaic_0001>
module attributes {stable_mosaic.version = 11 : i64} {
  func.func @_slicer_kernel(%arg0: memref<8x1xi32, #tpu.memory_space<vmem>>, %arg1: memref<8x1xi32, #tpu.memory_space<vmem>>, %arg2: memref<8x1xi32, #tpu.memory_space<vmem>>, %arg3: memref<8x128xi32, #tpu.memory_space<vmem>>) attributes {dimension_semantics = [], scalar_prefetch = 0 : i64, scratch_operands = 0 : i64, tpu.core_type = #tpu.core_type<tc>} {
    %0 = tpu.iota {dimensions = array<i32: 1>} : vector<8x128xi32>
    %c0 = arith.constant 0 : index
    %c0_0 = arith.constant 0 : index
    %1 = vector.load %arg1[%c0, %c0_0] : memref<8x1xi32, #tpu.memory_space<vmem>>, vector<8x1xi32>
    %2 = vector.broadcast %1 : vector<8x1xi32> to vector<8x128xi32>
    %3 = arith.addi %2, %0 : vector<8x128xi32>
    %c15_i32 = arith.constant 15 : i32
    %4 = vector.broadcast %c15_i32 : i32 to vector<8x128xi32>
    %5 = arith.andi %3, %4 : vector<8x128xi32>
    %c4_i32 = arith.constant 4 : i32
    %6 = vector.broadcast %c4_i32 : i32 to vector<8x128xi32>
    %7 = arith.shrsi %3, %6 : vector<8x128xi32>
    %c20_i32 = arith.constant 20 : i32
    %8 = vector.broadcast %c20_i32 : i32 to vector<8x128xi32>
    %9 = arith.muli %7, %8 : vector<8x128xi32>
    %10 = arith.addi %9, %5 : vector<8x128xi32>
    %c2_i32 = arith.constant 2 : i32
    %11 = vector.broadcast %c2_i32 : i32 to vector<8x128xi32>
    %12 = arith.shrsi %5, %11 : vector<8x128xi32>
    %13 = arith.addi %10, %12 : vector<8x128xi32>
    %c0_1 = arith.constant 0 : index
    %c0_2 = arith.constant 0 : index
    %14 = vector.load %arg2[%c0_1, %c0_2] : memref<8x1xi32, #tpu.memory_space<vmem>>, vector<8x1xi32>
    %15 = vector.broadcast %14 : vector<8x1xi32> to vector<8x128xi32>
    %16 = arith.cmpi slt, %0, %15 : vector<8x128xi32>
    %c0_3 = arith.constant 0 : index
    %c0_4 = arith.constant 0 : index
    %17 = vector.load %arg0[%c0_3, %c0_4] : memref<8x1xi32, #tpu.memory_space<vmem>>, vector<8x1xi32>
    %18 = vector.broadcast %17 : vector<8x1xi32> to vector<8x128xi32>
    %19 = arith.subi %13, %18 : vector<8x128xi32>
    %c-1_i32 = arith.constant -1 : i32
    %20 = vector.broadcast %c-1_i32 : i32 to vector<8x128xi32>
    %21 = arith.select %16, %19, %20 : vector<8x128xi1>, vector<8x128xi32>
    %c0_5 = arith.constant 0 : index
    %c0_6 = arith.constant 0 : index
    %22 = vector.load %arg3[%c0_5, %c0_6] : memref<8x128xi32, #tpu.memory_space<vmem>>, vector<8x128xi32>
    tpu.vector_store %arg3[%c0_5, %c0_6], %21 {strides = array<i32>} : memref<8x128xi32, #tpu.memory_space<vmem>>, vector<8x128xi32>,
    return
  }
}

</mosaic_0001>

<llo_original>
// kernel: _slicer_call.1
$region0: #{_slicer_call.1}
  #allocation0 [shape = 'u32[]', space=smem, size = 0x4, offset = 0x4, fixed_abs, tag = 'smem constant byte address 0x4 - core index']
  #allocation1 [shape = 'u32[144,128]{1,0:T(1,128)}', space=vmem, size = 0x12000, scoped, tag = 'internal scratch']
  %s0 = inlined_call_operand.vmem [shape: s32[8,1], index: 0, kind: input, shape index: {}]
  %s1 = inlined_call_operand.vmem [shape: s32[8,1], index: 1, kind: input, shape index: {}]
  %s2 = inlined_call_operand.vmem [shape: s32[8,1], index: 2, kind: input, shape index: {}]
  %s3 = inlined_call_operand.hbm [shape: s32[8,128], index: 3, kind: output, shape index: {}]
  %s4 = sld [smem:[#allocation0]]
  $region22: #{_slicer_call.1} parent=0
    _
  %s6 = ssub.s32 1, %s4
  %s7 = scalar_select 0, %s6, %s4
  $region1: #{_slicer_call.1} parent=0
    #allocation2 [shape = 'u8[4096]{0}', space=vmem, size = 0x1000, scoped, tag = 'output window, operand 0, single buffered']
    #allocation3 [shape = 's32[1]{0}', space=sflag, size = 0x4, scoped, tag = 'scoped memory for _slicer_call.1']
    %8 = vsyncpa [#allocation3], 0
    // Predicated region
    $region2: #{_slicer_call.1} parent=1 // pred_check
      _
    $region3: #{_slicer_call.1} parent=1 // pred_check_branch
      %10 = sbr.rel (0) target = $region5
    $region4: #{_slicer_call.1} parent=1 // pred_region
      _
    $region5: #{_slicer_call.1} parent=1 // pred_fallthru
      _
    // Predicated region
    $region6: #{_slicer_call.1} parent=1 // pred_check
      _
    $region7: #{_slicer_call.1} parent=1 // pred_check_branch
      %12 = sbr.rel (0) target = $region9
    $region8: #{_slicer_call.1} parent=1 // pred_region
      _
    $region9: #{_slicer_call.1} parent=1 // pred_fallthru
      _
    // Predicated region
    $region10: #{_slicer_call.1} parent=1 // pred_check
      _
    $region11: #{_slicer_call.1} parent=1 // pred_check_branch
      %14 = sbr.rel (0) target = $region13
    $region12: #{_slicer_call.1} parent=1 // pred_region
      _
    $region13: #{_slicer_call.1} parent=1 // pred_fallthru
      _
    %v15 = vlaneseq
    %v16 = vand.u32 %v15, 127
    %v17 = vld [vmem:[%s1] sm:$0xff]
    %18 = vset.pattern.permute.xlu0 0
    %19 = vperm.xlu0 %18, %v17
    %v20 = vpop.permute.xlu0 %19
    %v21 = vadd.s32 %v20, %v16
    %v22 = vand.u32 %v21, 15
    %v23 = vshra.s32 %v21, 4
    %v24 = vmul.u32 %v23, 20
    %v25 = vadd.s32 %v24, %v22
    %v26 = vshra.s32 %v22, 2
    %v27 = vadd.s32 %v25, %v26
    %v28 = vld [vmem:[%s2] sm:$0xff]
    %29 = vset.pattern.permute.xlu0 0
    %30 = vperm.xlu0 %29, %v28
    %v31 = vpop.permute.xlu0 %30
    %vm32 = vcmp.lt.s32.totalorder %v16, %v31
    %v33 = vld [vmem:[%s0] sm:$0xff]
    %34 = vset.pattern.permute.xlu0 0
    %35 = vperm.xlu0 %34, %v33
    %v36 = vpop.permute.xlu0 %35
    %v37 = vsub.s32 %v27, %v36
    %v38 = vsel %vm32, %v37, 4294967295
    %39 = vst [vmem:[#allocation2] sm:$0xff] %v38
    // Predicated region
    $region14: #{_slicer_call.1} parent=1 // pred_check
      _
    $region15: #{_slicer_call.1} parent=1 // pred_check_branch
      %41 = sbr.rel (0) target = $region17
    $region16: #{_slicer_call.1} parent=1 // pred_region
      %s43 = ssub.s32 128, 128
      %44 = vsyncadd [#allocation3], %s43
      %s46 = sshll.u32 [#allocation2], 4
      %s47 = int_to_ptr.vmem [resolvable:$true] %s46
      %49 = dma.vmem_to_hbm [thread:$0]  %s47, 128, %s3, [#allocation3]
    $region17: #{_slicer_call.1} parent=1 // pred_fallthru
      _
    // Predicated region
    $region18: #{_slicer_call.1} parent=1 // pred_check
      _
    $region19: #{_slicer_call.1} parent=1 // pred_check_branch
      %51 = sbr.rel (0) target = $region21
    $region20: #{_slicer_call.1} parent=1 // pred_region
      %52 = dma.done [#allocation3], 128
    $region21: #{_slicer_call.1} parent=1 // pred_fallthru
      _
    %53 = vsyncpa [#allocation3], 1

</llo_original>
